<compile_context>
chip_gen: v7x
topology: tpu7x:2x2x1
jax: 0.10.0
libtpu: 0.0.40
codegen_flags: <defaults>
</compile_context>

<pallas_src>
import functools

import jax
import jax.numpy as jnp
from jax import lax
from jax.experimental import pallas as pl
from jax.experimental.pallas import tpu as pltpu


def _round_up(x, m):
    return ((x + m - 1) // m) * m


def _fake_quant(x, amax):
    """Symmetric per-tensor int8 fake quantization (TensorQuantizer, 8 bit,
    narrow_range=False -> clamp to [-128, 127])."""
    scale = 127.0 / amax
    q = jnp.clip(jnp.round(x * scale), -128.0, 127.0)
    return q / scale


# -----------------------------------------------------------------------------
# Kernel: one MXU matmul over the full (padded) K per row tile, then the fused
#         epilogue: dequant + bias + fake-quant(local) + fake-quant(residual)
#         + add + LayerNorm.
# -----------------------------------------------------------------------------
def _qdqbert_output_kernel(x_ref, w_ref, p_ref, res_ref, o_ref, *,
                           s_in, amax_local, amax_res, eps):
    # Dense input quantizer: quantize the activation tile onto the int8 grid.
    # Integer values <= 127 are exact in bf16, so the bf16 MXU matmul below
    # accumulates the exact integer dot product into f32.
    x = x_ref[...].astype(jnp.float32)
    xq = jnp.clip(jnp.round(x * s_in), -128.0, 127.0).astype(jnp.bfloat16)
    acc = jnp.dot(xq, w_ref[...], preferred_element_type=jnp.float32)

    # Packed per-channel parameters: row 0 = dequant scale, 1 = bias,
    # 2 = LN gamma, 3 = LN beta (rows 4..7 are zero padding).
    dq = p_ref[0:1, :]
    bias = p_ref[1:2, :]
    gamma = p_ref[2:3, :]
    beta = p_ref[3:4, :]

    # Dequantize (combined activation x per-channel-weight scale) + bias.
    h = acc * dq + bias
    # dropout: identity in eval mode.
    local = _fake_quant(h, amax_local)                  # add_local quantizer
    resid = _fake_quant(res_ref[...].astype(jnp.float32), amax_res)
    y = local + resid

    # LayerNorm over the hidden (lane) axis.
    mean = jnp.mean(y, axis=-1, keepdims=True)
    c = y - mean
    var = jnp.mean(c * c, axis=-1, keepdims=True)
    yn = c * lax.rsqrt(var + eps)
    o_ref[...] = (yn * gamma + beta).astype(o_ref.dtype)


# -----------------------------------------------------------------------------
# One-time parameter prep (hoisted out of the per-forward path).
# -----------------------------------------------------------------------------
def prepare_params(params):
    w = params["dense_weight"].astype(jnp.float32)       # (hidden, intermediate)
    N, K = w.shape
    # QuantLinear weight quantizer: per-channel (axis=0) symmetric int8.
    w_amax = jnp.maximum(jnp.max(jnp.abs(w), axis=1, keepdims=True), 1e-6)
    w_scale = 127.0 / w_amax                              # (N, 1)
    w_q = jnp.clip(jnp.round(w * w_scale), -128.0, 127.0)  # integer-valued

    amax_in = max(float(params["amax_dense_input"]), 1e-6)
    s_in = 127.0 / amax_in
    dequant = (1.0 / (s_in * w_scale)).reshape(N).astype(jnp.float32)

    Kp = _round_up(K, 128)                                # lane-aligned K
    w_q_t = jnp.pad(w_q.T, ((0, Kp - K), (0, 0))).astype(jnp.bfloat16)  # (Kp, N)

    # Pack dequant / bias / gamma / beta into one (8, N) block (one small DMA,
    # no per-vector sublane padding waste).
    packed = jnp.zeros((8, N), jnp.float32)
    packed = packed.at[0].set(dequant)
    packed = packed.at[1].set(params["dense_bias"].astype(jnp.float32))
    packed = packed.at[2].set(params["ln_weight"].astype(jnp.float32))
    packed = packed.at[3].set(params["ln_bias"].astype(jnp.float32))

    return {
        "K": K, "N": N, "Kp": Kp,
        "w_q_t": w_q_t,                                   # integer-valued bf16
        "packed": packed,                                 # (8, N) f32
        "s_in": s_in,
        "amax_local": max(float(params["amax_add_local"]), 1e-6),
        "amax_res": max(float(params["amax_add_residual"]), 1e-6),
        "eps": float(params["ln_eps"]),
    }


# -----------------------------------------------------------------------------
# Row-tile selection: multiple of 8, prefer exact divisor of M (no padding
# copy), and keep >= 2 row tiles when there is enough work (v7x megacore).
# -----------------------------------------------------------------------------
def _pick_row_tile(M, tm_max):
    tm_max = max(8, (tm_max // 8) * 8)

    def largest_divisor_tile(limit):
        t = min(limit, (M // 8) * 8)
        while t >= 8:
            if M % t == 0:
                return t
            t -= 8
        return None

    best = largest_divisor_tile(tm_max)
    if best is None:
        best = min(tm_max, _round_up(M, 8))   # accept padding of the last tile
    # If a single tile would cover all rows but there is enough work for two,
    # split so both v7x TensorCores participate (no effect on v5e/v6e).
    if best >= M and M > 8:
        half_limit = max(8, (((best + 1) // 2) // 8) * 8)
        best = largest_divisor_tile(half_limit) or half_limit
    return best


# -----------------------------------------------------------------------------
# Wrapper
# -----------------------------------------------------------------------------
def qdqbert_output(hidden_states, input_tensor, prepped, *, tm=256):
    """hidden_states: (B, S, intermediate), input_tensor: (B, S, hidden).

    Inputs may be f32 or bf16 (bf16 halves the activation/residual/output HBM
    traffic; the kernel quantizes internally either way).
    """
    B, S, K = hidden_states.shape
    N = input_tensor.shape[-1]
    assert K == prepped["K"] and N == prepped["N"]
    M = B * S
    Kp = prepped["Kp"]

    # NOTE: default tm=256 fits v7x's 64 MiB per-TC VMEM with f32 inputs at
    # BERT-large sizes; on v5e/v6e (128 MiB VMEM) tm=512 is also safe.
    tm = _pick_row_tile(M, tm)
    Mp = _round_up(M, tm)

    x2d = hidden_states.reshape(M, K)
    r2d = input_tensor.reshape(M, N)
    # Only pad when actually needed (the common production case — K % 128 == 0
    # and tm | M — does no extra HBM copies here).
    if Mp != M or Kp != K:
        x2d = jnp.pad(x2d, ((0, Mp - M), (0, Kp - K)))
    if Mp != M:
        r2d = jnp.pad(r2d, ((0, Mp - M), (0, 0)))

    # Explicit per-TensorCore VMEM budget: resident weight (allocated with two
    # buffers by the pipeline, but DMA'd only once thanks to the constant
    # index_map) + double-buffered activation / residual / output tiles.
    x_bytes = jnp.dtype(hidden_states.dtype).itemsize
    r_bytes = jnp.dtype(input_tensor.dtype).itemsize
    o_bytes = x_bytes
    n_pad = _round_up(N, 128)
    vmem_needed = (2 * tm * Kp * x_bytes          # activation tiles
                   + 2 * Kp * n_pad * 2           # resident bf16 weight buffers
                   + 2 * tm * n_pad * r_bytes     # residual tiles
                   + 2 * tm * n_pad * o_bytes     # output tiles
                   + 2 * 8 * n_pad * 4)           # packed dequant/bias/gamma/beta
    vmem_limit = int(max(32 << 20,
                         min(128 << 20, vmem_needed + vmem_needed // 4 + (4 << 20))))

    kernel = functools.partial(
        _qdqbert_output_kernel,
        s_in=prepped["s_in"],
        amax_local=prepped["amax_local"],
        amax_res=prepped["amax_res"],
        eps=prepped["eps"],
    )

    # TODO(synk): for toy hidden sizes (< 128) the output store is a masked
    # partial store; production hidden sizes (768/1024) are already lane-dense.
    out2d = pl.pallas_call(
        kernel,
        out_shape=jax.ShapeDtypeStruct((Mp, N), hidden_states.dtype),
        grid_spec=pltpu.PrefetchScalarGridSpec(
            num_scalar_prefetch=0,
            grid=(Mp // tm,),
            in_specs=[
                # activations: one (tm, Kp) tile per grid step
                pl.BlockSpec((tm, Kp), lambda i: (i, 0)),
                # quantized weight: full block, constant index -> fetched from
                # HBM once and kept resident in VMEM across all row tiles
                pl.BlockSpec((Kp, N), lambda i: (0, 0)),
                # packed dequant/bias/gamma/beta, also resident
                pl.BlockSpec((8, N), lambda i: (0, 0)),
                # residual
                pl.BlockSpec((tm, N), lambda i: (i, 0)),
            ],
            out_specs=pl.BlockSpec((tm, N), lambda i: (i, 0)),
        ),
        compiler_params=pltpu.CompilerParams(
            dimension_semantics=("parallel",),
            vmem_limit_bytes=vmem_limit,
        ),
    )(x2d, prepped["w_q_t"], prepped["packed"], r2d)

    return out2d[:M].reshape(B, S, N)


# -----------------------------------------------------------------------------
# Deterministic parameter init + example run
# -----------------------------------------------------------------------------
def init_params(key, intermediate_size, hidden_size):
    k_w, k_b = jax.random.split(key, 2)
    return {
        # torch Linear weight layout: (out_features, in_features)
        "dense_weight": jax.random.normal(
            k_w, (hidden_size, intermediate_size), jnp.float32) * 0.05,
        "dense_bias": jax.random.normal(k_b, (hidden_size,), jnp.float32) * 0.01,
        "ln_weight": jnp.ones((hidden_size,), jnp.float32),
        "ln_bias": jnp.zeros((hidden_size,), jnp.float32),
        "ln_eps": 1e-12,
        # TensorQuantizer amax buffers (deterministic "calibrated" values)
        "amax_dense_input": 4.0,
        "amax_add_local": 4.0,
        "amax_add_residual": 4.0,
    }


if __name__ == "__main__":
    B, S = 2, 8
    intermediate_size, hidden_size = 128, 32

    key = jax.random.PRNGKey(0)
    k_p, k_x, k_r = jax.random.split(key, 3)

    params = init_params(k_p, intermediate_size, hidden_size)
    prepped = prepare_params(params)

    hidden_states = jax.random.normal(k_x, (B, S, intermediate_size), jnp.float32)
    input_tensor = jax.random.normal(k_r, (B, S, hidden_size), jnp.float32)

    out = qdqbert_output(hidden_states, input_tensor, prepped, tm=256)
    jax.block_until_ready(out)

    # --- pure-JAX reference, straight PyTorch-style ordering ----------------
    def ref(hs, it, p):
        w = p["dense_weight"]
        w_amax = jnp.maximum(jnp.max(jnp.abs(w), axis=1, keepdims=True), 1e-6)
        ws = 127.0 / w_amax
        w_fq = jnp.clip(jnp.round(w * ws), -128.0, 127.0) / ws
        x = _fake_quant(hs, p["amax_dense_input"])
        h = jnp.einsum("bsk,nk->bsn", x, w_fq) + p["dense_bias"]
        h = _fake_quant(h, p["amax_add_local"]) + _fake_quant(it, p["amax_add_residual"])
        mean = h.mean(-1, keepdims=True)
        var = ((h - mean) ** 2).mean(-1, keepdims=True)
        return (h - mean) * lax.rsqrt(var + p["ln_eps"]) * p["ln_weight"] + p["ln_bias"]

    expected = ref(hidden_states, input_tensor, params)
    err = jnp.abs(out - expected)
    # The kernel accumulates the exact integer dot product and dequantizes once
    # at the end; the reference dequantizes each operand before the matmul.
    # Both realize the same int8 fake-quant math, but an element landing
    # exactly on a rounding boundary of the add_local quantizer may flip by one
    # quantization step (amax/127).  Bound outliers by ~2 steps and require the
    # bulk of elements to match tightly.
    assert float(jnp.max(err)) < 7e-2, f"max err {float(jnp.max(err))}"
    assert float(jnp.mean(err < 2e-3)) > 0.98, "too many mismatches vs reference"

    print("KERNEL_OK")
</pallas_src>

<mosaic_0001>
module attributes {stable_mosaic.version = 11 : i64} {
  func.func @_qdqbert_output_kernel(%arg0: i32, %arg1: memref<8x128xf32, #tpu.memory_space<vmem>>, %arg2: memref<128x32xbf16, #tpu.memory_space<vmem>>, %arg3: memref<8x32xf32, #tpu.memory_space<vmem>>, %arg4: memref<8x32xf32, #tpu.memory_space<vmem>>, %arg5: memref<8x32xf32, #tpu.memory_space<vmem>>) attributes {dimension_semantics = [#tpu.dimension_semantics<parallel>], iteration_bounds = array<i64: 2>, scalar_prefetch = 0 : i64, scratch_operands = 0 : i64, tpu.core_type = #tpu.core_type<tc>, window_params = [{transform_indices = @transform_0, window_bounds = array<i64: 8, 128>}, {pipeline_mode = #tpu.pipeline_mode<synchronous>, transform_indices = @transform_1, window_bounds = array<i64: 128, 32>}, {pipeline_mode = #tpu.pipeline_mode<synchronous>, transform_indices = @transform_2, window_bounds = array<i64: 8, 32>}, {transform_indices = @transform_3, window_bounds = array<i64: 8, 32>}, {transform_indices = @transform_4, window_bounds = array<i64: 8, 32>}]} {
    %c0 = arith.constant 0 : index
    %c0_0 = arith.constant 0 : index
    %0 = vector.load %arg1[%c0, %c0_0] : memref<8x128xf32, #tpu.memory_space<vmem>>, vector<8x128xf32>
    %cst = arith.constant 3.175000e+01 : f32
    %1 = vector.broadcast %cst : f32 to vector<8x128xf32>
    %2 = arith.mulf %0, %1 : vector<8x128xf32>
    %3 = math.roundeven %2 : vector<8x128xf32>
    %cst_1 = arith.constant -1.280000e+02 : f32
    %cst_2 = arith.constant 1.270000e+02 : f32
    %4 = vector.broadcast %cst_1 : f32 to vector<8x128xf32>
    %5 = arith.maximumf %4, %3 : vector<8x128xf32>
    %6 = vector.broadcast %cst_2 : f32 to vector<8x128xf32>
    %7 = arith.minimumf %6, %5 : vector<8x128xf32>
    %8 = arith.truncf %7 : vector<8x128xf32> to vector<8x128xbf16>
    %c0_3 = arith.constant 0 : index
    %c0_4 = arith.constant 0 : index
    %9 = vector.load %arg2[%c0_3, %c0_4] : memref<128x32xbf16, #tpu.memory_space<vmem>>, vector<128x32xbf16>
    %cst_5 = arith.constant dense<0.000000e+00> : vector<8x32xf32>
    %10 = tpu.matmul %8, %9, %cst_5 {dimension_numbers = #tpu.dot_dimension_numbers<[1], [0], [0], [1], [0, 0, 1, 1], [], []>} : vector<8x128xbf16>, vector<128x32xbf16>, vector<8x32xf32> -> vector<8x32xf32>
    %c0_6 = arith.constant 0 : index
    %c0_7 = arith.constant 0 : index
    %11 = vector.load %arg3[%c0_6, %c0_7] : memref<8x32xf32, #tpu.memory_space<vmem>>, vector<1x32xf32>
    %c1 = arith.constant 1 : index
    %c0_8 = arith.constant 0 : index
    %12 = vector.load %arg3[%c1, %c0_8] : memref<8x32xf32, #tpu.memory_space<vmem>>, vector<1x32xf32>
    %c2 = arith.constant 2 : index
    %c0_9 = arith.constant 0 : index
    %13 = vector.load %arg3[%c2, %c0_9] : memref<8x32xf32, #tpu.memory_space<vmem>>, vector<1x32xf32>
    %c3 = arith.constant 3 : index
    %c0_10 = arith.constant 0 : index
    %14 = vector.load %arg3[%c3, %c0_10] : memref<8x32xf32, #tpu.memory_space<vmem>>, vector<1x32xf32>
    %15 = vector.broadcast %11 : vector<1x32xf32> to vector<8x32xf32>
    %16 = arith.mulf %10, %15 : vector<8x32xf32>
    %17 = vector.broadcast %12 : vector<1x32xf32> to vector<8x32xf32>
    %18 = arith.addf %16, %17 : vector<8x32xf32>
    %cst_11 = arith.constant 3.175000e+01 : f32
    %19 = vector.broadcast %cst_11 : f32 to vector<8x32xf32>
    %20 = arith.mulf %18, %19 : vector<8x32xf32>
    %21 = math.roundeven %20 : vector<8x32xf32>
    %cst_12 = arith.constant -1.280000e+02 : f32
    %cst_13 = arith.constant 1.270000e+02 : f32
    %22 = vector.broadcast %cst_12 : f32 to vector<8x32xf32>
    %23 = arith.maximumf %22, %21 : vector<8x32xf32>
    %24 = vector.broadcast %cst_13 : f32 to vector<8x32xf32>
    %25 = arith.minimumf %24, %23 : vector<8x32xf32>
    %cst_14 = arith.constant 3.175000e+01 : f32
    %26 = vector.broadcast %cst_14 : f32 to vector<8x32xf32>
    %27 = arith.divf %25, %26 : vector<8x32xf32>
    %c0_15 = arith.constant 0 : index
    %c0_16 = arith.constant 0 : index
    %28 = vector.load %arg4[%c0_15, %c0_16] : memref<8x32xf32, #tpu.memory_space<vmem>>, vector<8x32xf32>
    %cst_17 = arith.constant 3.175000e+01 : f32
    %29 = vector.broadcast %cst_17 : f32 to vector<8x32xf32>
    %30 = arith.mulf %28, %29 : vector<8x32xf32>
    %31 = math.roundeven %30 : vector<8x32xf32>
    %cst_18 = arith.constant -1.280000e+02 : f32
    %cst_19 = arith.constant 1.270000e+02 : f32
    %32 = vector.broadcast %cst_18 : f32 to vector<8x32xf32>
    %33 = arith.maximumf %32, %31 : vector<8x32xf32>
    %34 = vector.broadcast %cst_19 : f32 to vector<8x32xf32>
    %35 = arith.minimumf %34, %33 : vector<8x32xf32>
    %cst_20 = arith.constant 3.175000e+01 : f32
    %36 = vector.broadcast %cst_20 : f32 to vector<8x32xf32>
    %37 = arith.divf %35, %36 : vector<8x32xf32>
    %38 = arith.addf %27, %37 : vector<8x32xf32>
    %cst_21 = arith.constant dense<0.000000e+00> : vector<8xf32>
    %39 = vector.multi_reduction <add>, %38, %cst_21 [1] : vector<8x32xf32> to vector<8xf32>
    %40 = vector.shape_cast %39 : vector<8xf32> to vector<8x1xf32>
    %cst_22 = arith.constant 3.200000e+01 : f32
    %41 = vector.broadcast %cst_22 : f32 to vector<8x1xf32>
    %42 = arith.divf %40, %41 : vector<8x1xf32>
    %43 = vector.broadcast %42 : vector<8x1xf32> to vector<8x32xf32>
    %44 = arith.subf %38, %43 : vector<8x32xf32>
    %45 = arith.mulf %44, %44 : vector<8x32xf32>
    %cst_23 = arith.constant dense<0.000000e+00> : vector<8xf32>
    %46 = vector.multi_reduction <add>, %45, %cst_23 [1] : vector<8x32xf32> to vector<8xf32>
    %47 = vector.shape_cast %46 : vector<8xf32> to vector<8x1xf32>
    %cst_24 = arith.constant 3.200000e+01 : f32
    %48 = vector.broadcast %cst_24 : f32 to vector<8x1xf32>
    %49 = arith.divf %47, %48 : vector<8x1xf32>
    %cst_25 = arith.constant 9.99999996E-13 : f32
    %50 = vector.broadcast %cst_25 : f32 to vector<8x1xf32>
    %51 = arith.addf %49, %50 : vector<8x1xf32>
    %52 = math.rsqrt %51 : vector<8x1xf32>
    %53 = vector.broadcast %52 : vector<8x1xf32> to vector<8x32xf32>
    %54 = arith.mulf %44, %53 : vector<8x32xf32>
    %55 = vector.broadcast %13 : vector<1x32xf32> to vector<8x32xf32>
    %56 = arith.mulf %54, %55 : vector<8x32xf32>
    %57 = vector.broadcast %14 : vector<1x32xf32> to vector<8x32xf32>
    %58 = arith.addf %56, %57 : vector<8x32xf32>
    %c0_26 = arith.constant 0 : index
    %c0_27 = arith.constant 0 : index
    %59 = vector.load %arg5[%c0_26, %c0_27] : memref<8x32xf32, #tpu.memory_space<vmem>>, vector<8x32xf32>
    tpu.vector_store %arg5[%c0_26, %c0_27], %58 {strides = array<i32>} : memref<8x32xf32, #tpu.memory_space<vmem>>, vector<8x32xf32>,
    return
  }
  func.func @transform_0(%arg0: i32) -> (i32, i32) {
    %c0_i32 = arith.constant 0 : i32
    %c0_i32_0 = arith.constant 0 : i32
    return %arg0, %c0_i32 : i32, i32
  }
  func.func @transform_1(%arg0: i32) -> (i32, i32) {
    %c0_i32 = arith.constant 0 : i32
    %c0_i32_0 = arith.constant 0 : i32
    %c0_i32_1 = arith.constant 0 : i32
    return %c0_i32, %c0_i32_0 : i32, i32
  }
  func.func @transform_2(%arg0: i32) -> (i32, i32) {
    %c0_i32 = arith.constant 0 : i32
    %c0_i32_0 = arith.constant 0 : i32
    %c0_i32_1 = arith.constant 0 : i32
    return %c0_i32, %c0_i32_0 : i32, i32
  }
  func.func @transform_3(%arg0: i32) -> (i32, i32) {
    %c0_i32 = arith.constant 0 : i32
    %c0_i32_0 = arith.constant 0 : i32
    return %arg0, %c0_i32 : i32, i32
  }
  func.func @transform_4(%arg0: i32) -> (i32, i32) {
    %c0_i32 = arith.constant 0 : i32
    %c0_i32_0 = arith.constant 0 : i32
    return %arg0, %c0_i32 : i32, i32
  }
}

</mosaic_0001>

<llo_original>
// kernel: tpu_custom_call.1
$region0: #{tpu_custom_call.1}
  #allocation0 [shape = 'u32[]', space=smem, size = 0x4, offset = 0x4, fixed_abs, tag = 'smem constant byte address 0x4 - core index']
  #allocation1 [shape = 'u32[144,128]{1,0:T(1,128)}', space=vmem, size = 0x12000, scoped, tag = 'internal scratch']
  %s0 = inlined_call_operand.vmem [shape: f32[16,128], index: 0, kind: input, shape index: {}]
  %s1 = inlined_call_operand.vmem [shape: bf16[128,32], index: 1, kind: input, shape index: {}]
  %s2 = inlined_call_operand.vmem [shape: f32[8,32], index: 2, kind: input, shape index: {}]
  %s3 = inlined_call_operand.vmem [shape: f32[16,32], index: 3, kind: input, shape index: {}]
  %s4 = inlined_call_operand.hbm [shape: f32[16,32], index: 4, kind: output, shape index: {}]
  %s5 = sld [smem:[#allocation0]]
  $region49: #{tpu_custom_call.1} parent=0
    _
  %s7 = ssub.s32 1, %s5
  %s8 = scalar_select 0, %s7, %s5
  $region1: #{tpu_custom_call.1} parent=0
    #allocation2 [shape = 'u8[8192]{0}', space=vmem, size = 0x2000, scoped, tag = 'output window, operand 0']
    #allocation3 [shape = 's32[2]{0}', space=sflag, size = 0x8, scoped, tag = 'scoped memory for tpu_custom_call.1']
    %9 = vsyncpa [#allocation3], 0
    %s10 = scalar_lea.sflag [#allocation3], 1
    %11 = vsyncpa %s10, 0
    loop: start=0, step=1, limit=4
    $region2: #{tpu_custom_call.1} parent=1 // loop_pre_header
      _
    $region3: #{tpu_custom_call.1} parent=1 // loop_header
      %s13 = sphi 0, %s17
      %p14 = scmp.ge.s32.totalorder %s13, 4
      %s23 = sphi 0, %s25
      %s26 = sphi 0, %s23
      %s27 = sphi 0, %s26
      %s43 = sphi 0, %s27
      %s47 = sphi 0, %s47
      %s49 = sphi 0, %s47
      %s50 = sphi 0, %s49
      %s64 = sphi 0, %s50
      %s68 = sphi 0, %s68
      %s70 = sphi 0, %s68
      %s71 = sphi 0, %s70
      %s85 = sphi 0, %s71
      %s91 = sphi 0, %s93
      %s94 = sphi 0, %s91
      %s95 = sphi 0, %s94
      %s111 = sphi 0, %s95
      %s117 = sphi 0, %s119
      %s120 = sphi 0, %s117
      %s121 = sphi 0, %s120
      %s137 = sphi 0, %s121
    $region4: #{tpu_custom_call.1} parent=1 // loop_header_branch
      %16 = sbr.rel (%p14) target = $region8
    $region5: #{tpu_custom_call.1} parent=1 // loop_body
      %s18 = ssub.s32 %s13, 1
      %s19 = ssub.s32 %s13, 2
      %s20 = sadd.s32 %s13, 1
      %s21 = ssub.s32 %s13, %s20
      %p22 = scmp.eq.s32.totalorder %s21, 0
      %s24 = sadd.s32 %s23, 1
      %s25 = scalar_select %p22, %s23, %s24
      %p28 = pneg %p22
      %p29 = scmp.eq.s32.totalorder %s13, 1
      %p30 = por %p28, %p29
      %p31 = scmp.ne.s32.totalorder %s23, %s26
      %p32 = scmp.eq.s32.totalorder %s13, 0
      %p33 = por %p31, %p32
      %p34 = scmp.ne.s32.totalorder %s23, %s26
      %p35 = scmp.eq.s32.totalorder %s18, 1
      %p36 = por %p34, %p35
      %p37 = scmp.ne.s32.totalorder %s26, %s27
      %p38 = scmp.eq.s32.totalorder %s18, 0
      %p39 = por %p37, %p38
      %p40 = scmp.ne.s32.totalorder %s26, %s27
      %p41 = scmp.eq.s32.totalorder %s19, 1
      %p42 = por %p40, %p41
      %p44 = scmp.ne.s32.totalorder %s27, %s43
      %p45 = scmp.eq.s32.totalorder %s19, 0
      %p46 = por %p44, %p45
      %s48 = sadd.s32 %s47, 1
      %p51 = scmp.eq.s32.totalorder %s13, 1
      %p52 = scmp.ne.s32.totalorder %s47, %s49
      %p53 = scmp.eq.s32.totalorder %s13, 0
      %p54 = por %p52, %p53
      %p55 = scmp.ne.s32.totalorder %s47, %s49
      %p56 = scmp.eq.s32.totalorder %s18, 1
      %p57 = por %p55, %p56
      %p58 = scmp.ne.s32.totalorder %s49, %s50
      %p59 = scmp.eq.s32.totalorder %s18, 0
      %p60 = por %p58, %p59
      %p61 = scmp.ne.s32.totalorder %s49, %s50
      %p62 = scmp.eq.s32.totalorder %s19, 1
      %p63 = por %p61, %p62
      %p65 = scmp.ne.s32.totalorder %s50, %s64
      %p66 = scmp.eq.s32.totalorder %s19, 0
      %p67 = por %p65, %p66
      %s69 = sadd.s32 %s68, 1
      %p72 = scmp.eq.s32.totalorder %s13, 1
      %p73 = scmp.ne.s32.totalorder %s68, %s70
      %p74 = scmp.eq.s32.totalorder %s13, 0
      %p75 = por %p73, %p74
      %p76 = scmp.ne.s32.totalorder %s68, %s70
      %p77 = scmp.eq.s32.totalorder %s18, 1
      %p78 = por %p76, %p77
      %p79 = scmp.ne.s32.totalorder %s70, %s71
      %p80 = scmp.eq.s32.totalorder %s18, 0
      %p81 = por %p79, %p80
      %p82 = scmp.ne.s32.totalorder %s70, %s71
      %p83 = scmp.eq.s32.totalorder %s19, 1
      %p84 = por %p82, %p83
      %p86 = scmp.ne.s32.totalorder %s71, %s85
      %p87 = scmp.eq.s32.totalorder %s19, 0
      %p88 = por %p86, %p87
      %s89 = ssub.s32 %s13, %s20
      %p90 = scmp.eq.s32.totalorder %s89, 0
      %s92 = sadd.s32 %s91, 1
      %s93 = scalar_select %p90, %s91, %s92
      %p96 = pneg %p90
      %p97 = scmp.eq.s32.totalorder %s13, 1
      %p98 = por %p96, %p97
      %p99 = scmp.ne.s32.totalorder %s91, %s94
      %p100 = scmp.eq.s32.totalorder %s13, 0
      %p101 = por %p99, %p100
      %p102 = scmp.ne.s32.totalorder %s91, %s94
      %p103 = scmp.eq.s32.totalorder %s18, 1
      %p104 = por %p102, %p103
      %p105 = scmp.ne.s32.totalorder %s94, %s95
      %p106 = scmp.eq.s32.totalorder %s18, 0
      %p107 = por %p105, %p106
      %p108 = scmp.ne.s32.totalorder %s94, %s95
      %p109 = scmp.eq.s32.totalorder %s19, 1
      %p110 = por %p108, %p109
      %p112 = scmp.ne.s32.totalorder %s95, %s111
      %p113 = scmp.eq.s32.totalorder %s19, 0
      %p114 = por %p112, %p113
      %s115 = ssub.s32 %s13, %s20
      %p116 = scmp.eq.s32.totalorder %s115, 0
      %s118 = sadd.s32 %s117, 1
      %s119 = scalar_select %p116, %s117, %s118
      %p122 = pneg %p116
      %p123 = scmp.eq.s32.totalorder %s13, 1
      %p124 = por %p122, %p123
      %p125 = scmp.ne.s32.totalorder %s117, %s120
      %p126 = scmp.eq.s32.totalorder %s13, 0
      %p127 = por %p125, %p126
      %p128 = scmp.ne.s32.totalorder %s117, %s120
      %p129 = scmp.eq.s32.totalorder %s18, 1
      %p130 = por %p128, %p129
      %p131 = scmp.ne.s32.totalorder %s120, %s121
      %p132 = scmp.eq.s32.totalorder %s18, 0
      %p133 = por %p131, %p132
      %p134 = scmp.ne.s32.totalorder %s120, %s121
      %p135 = scmp.eq.s32.totalorder %s19, 1
      %p136 = por %p134, %p135
      %p138 = scmp.ne.s32.totalorder %s121, %s137
      %p139 = scmp.eq.s32.totalorder %s19, 0
      %p140 = por %p138, %p139
      %p141 = scmp.le.s32.totalorder 1, %s13
      %p142 = scmp.lt.s32.totalorder %s13, 3
      %p143 = pnand %p141, %p142
      %p144 = pneg %p143
      // Predicated region
      $region9: #{tpu_custom_call.1} parent=5 // pred_check
        _
      $region10: #{tpu_custom_call.1} parent=5 // pred_check_branch
        %146 = sbr.rel (%p143) target = $region12
      $region11: #{tpu_custom_call.1} parent=5 // pred_region
        %s147 = ssub.s32 %s13, 1
        // Predicated region
        $region13: #{tpu_custom_call.1} parent=11 // pred_check
          %p148 = pneg %p60
        $region14: #{tpu_custom_call.1} parent=11 // pred_check_branch
          %150 = sbr.rel (%p148) target = $region16
        $region15: #{tpu_custom_call.1} parent=11 // pred_region
          _
        $region16: #{tpu_custom_call.1} parent=11 // pred_fallthru
          _
        // Predicated region
        $region17: #{tpu_custom_call.1} parent=11 // pred_check
          %p151 = pneg %p81
        $region18: #{tpu_custom_call.1} parent=11 // pred_check_branch
          %153 = sbr.rel (%p151) target = $region20
        $region19: #{tpu_custom_call.1} parent=11 // pred_region
          _
        $region20: #{tpu_custom_call.1} parent=11 // pred_fallthru
          _
      $region12: #{tpu_custom_call.1} parent=5 // pred_fallthru
        _
      %p154 = scmp.lt.s32.totalorder %s13, 2
      // Predicated region
      $region21: #{tpu_custom_call.1} parent=5 // pred_check
        %p155 = pneg %p154
      $region22: #{tpu_custom_call.1} parent=5 // pred_check_branch
        %157 = sbr.rel (%p155) target = $region24
      $region23: #{tpu_custom_call.1} parent=5 // pred_region
        // Predicated region
        $region25: #{tpu_custom_call.1} parent=23 // pred_check
          %p158 = pneg %p33
        $region26: #{tpu_custom_call.1} parent=23 // pred_check_branch
          %160 = sbr.rel (%p158) target = $region28
        $region27: #{tpu_custom_call.1} parent=23 // pred_region
          %p161 = scmp.lt.s32.totalorder %s13, 1
          %s162 = scalar_select %p161, %s13, 1
          %s163 = smul.addr %s162, 8
          %s164 = scalar_lea.vmem %s0, %s163
        $region28: #{tpu_custom_call.1} parent=23 // pred_fallthru
          _
        // Predicated region
        $region29: #{tpu_custom_call.1} parent=23 // pred_check
          %p165 = pneg %p101
        $region30: #{tpu_custom_call.1} parent=23 // pred_check_branch
          %167 = sbr.rel (%p165) target = $region32
        $region31: #{tpu_custom_call.1} parent=23 // pred_region
          %p168 = scmp.lt.s32.totalorder %s13, 1
          %s169 = scalar_select %p168, %s13, 1
          %s170 = smul.addr %s169, 8
          %s171 = scalar_lea.vmem %s3, %s170
        $region32: #{tpu_custom_call.1} parent=23 // pred_fallthru
          _
      $region24: #{tpu_custom_call.1} parent=5 // pred_fallthru
        _
      %p172 = scmp.le.s32.totalorder 1, %s13
      %p173 = scmp.lt.s32.totalorder %s13, 3
      %p174 = pnand %p172, %p173
      %p175 = pneg %p174
      // Predicated region
      $region33: #{tpu_custom_call.1} parent=5 // pred_check
        _
      $region34: #{tpu_custom_call.1} parent=5 // pred_check_branch
        %177 = sbr.rel (%p174) target = $region36
      $region35: #{tpu_custom_call.1} parent=5 // pred_region
        %s178 = ssub.s32 %s13, 1
        %p179 = scmp.lt.s32.totalorder %s18, 1
        %s180 = scalar_select %p179, %s18, 1
        %s181 = smul.addr %s180, 8
        %s182 = scalar_lea.vmem %s0, %s181
        %p183 = pneg %p39
        %p184 = pneg %p36
        %p185 = pneg %p60
        %p186 = pneg %p57
        %p187 = pneg %p81
        %p188 = pneg %p78
        %p189 = scmp.lt.s32.totalorder %s18, 1
        %s190 = scalar_select %p189, %s18, 1
        %s191 = smul.addr %s190, 8
        %s192 = scalar_lea.vmem %s3, %s191
        %p193 = pneg %p107
        %p194 = pneg %p104
        %p195 = pneg %p133
        %p196 = pneg %p130
        %s197 = sand.u32 %s120, 1
        %s198 = scalar_lea.sflag [#allocation3], %s197
        %s199 = sand.u32 %s120, 1
        %s200 = smul.addr %s199, 8
        %s201 = scalar_lea.vmem [#allocation2], %s200
        %p202 = scmp.lt.s32.totalorder %s18, 1
        %s203 = scalar_select %p202, %s18, 1
        %s204 = smul.addr %s203, 8
        %s205 = scalar_lea.vmem %s0, %s204
        %p206 = scmp.lt.s32.totalorder %s18, 1
        %s207 = scalar_select %p206, %s18, 1
        %s208 = smul.addr %s207, 8
        %s209 = scalar_lea.vmem %s3, %s208
        %v211 = vld [vmem:[%s205] sm:$0xff]
        %v212 = vmul.f32 %v211, 31.75
        %v213 = vround.ne.pseudo %v212
        %v214 = vmax.f32 %v213, -128.0
        %v215 = vmin.f32 %v214, 127.0
        %v216 = vpack.c.bf16 %v215, %v215
        %v217 = vld [vmem:[%s1] sm:$0xf]
        %v218 = vld [vmem:[%s1 + $0x4] sm:$0xf]
        %v219 = vld [vmem:[%s1 + $0x8] sm:$0xf]
        %v220 = vld [vmem:[%s1 + $0xc] sm:$0xf]
        %v221 = vld [vmem:[%s1 + $0x10] sm:$0xf]
        %v222 = vld [vmem:[%s1 + $0x14] sm:$0xf]
        %v223 = vld [vmem:[%s1 + $0x18] sm:$0xf]
        %v224 = vld [vmem:[%s1 + $0x1c] sm:$0xf]
        %v225 = vld [vmem:[%s1 + $0x20] sm:$0xf]
        %v226 = vld [vmem:[%s1 + $0x24] sm:$0xf]
        %v227 = vld [vmem:[%s1 + $0x28] sm:$0xf]
        %v228 = vld [vmem:[%s1 + $0x2c] sm:$0xf]
        %v229 = vld [vmem:[%s1 + $0x30] sm:$0xf]
        %v230 = vld [vmem:[%s1 + $0x34] sm:$0xf]
        %v231 = vld [vmem:[%s1 + $0x38] sm:$0xf]
        %v232 = vld [vmem:[%s1 + $0x3c] sm:$0xf]
        %v249 = vunpack.c.l.b16 %v217
        %v250 = vunpack.c.l.b16 %v218
        %v251 = vunpack.c.l.b16 %v219
        %v252 = vunpack.c.l.b16 %v220
        %v253 = vunpack.c.l.b16 %v221
        %v254 = vunpack.c.l.b16 %v222
        %v255 = vunpack.c.l.b16 %v223
        %v256 = vunpack.c.l.b16 %v224
        %v257 = vunpack.c.l.b16 %v225
        %v258 = vunpack.c.l.b16 %v226
        %v259 = vunpack.c.l.b16 %v227
        %v260 = vunpack.c.l.b16 %v228
        %v261 = vunpack.c.l.b16 %v229
        %v262 = vunpack.c.l.b16 %v230
        %v263 = vunpack.c.l.b16 %v231
        %v264 = vunpack.c.l.b16 %v232
        %v265 = vpack.c.b16 %v250, %v249
        %v266 = vpack.c.b16 %v252, %v251
        %v267 = vpack.c.b16 %v254, %v253
        %v268 = vpack.c.b16 %v256, %v255
        %v269 = vpack.c.b16 %v258, %v257
        %v270 = vpack.c.b16 %v260, %v259
        %v271 = vpack.c.b16 %v262, %v261
        %v272 = vpack.c.b16 %v264, %v263
        %281 = vmatprep.subr.bf16.mxu0 0
        %282 = vmatpush1.bf16.msra.mxu0 %v265
        %283 = vmatprep.subr.bf16.mxu0 0
        %284 = vmatpush1.bf16.msra.mxu0 %v266
        %285 = vmatprep.subr.bf16.mxu0 0
        %286 = vmatpush1.bf16.msra.mxu0 %v267
        %287 = vmatprep.subr.bf16.mxu0 0
        %288 = vmatpush1.bf16.msra.mxu0 %v268
        %289 = vmatprep.subr.bf16.mxu0 0
        %290 = vmatpush1.bf16.msra.mxu0 %v269
        %291 = vmatprep.subr.bf16.mxu0 0
        %292 = vmatpush1.bf16.msra.mxu0 %v270
        %293 = vmatprep.subr.bf16.mxu0 0
        %294 = vmatpush1.bf16.msra.mxu0 %v271
        %295 = vmatprep.subr.bf16.mxu0 0
        %296 = vmatpush1.bf16.msra.mxu0 %v272
        %297 = vmatprep.subr.bf16.mxu0 0
        %298 = vmatpush1.bf16.msra.mxu0 0
        %299 = vmatprep.subr.bf16.mxu0 0
        %300 = vmatpush1.bf16.msra.mxu0 0
        %301 = vmatprep.subr.bf16.mxu0 0
        %302 = vmatpush1.bf16.msra.mxu0 0
        %303 = vmatprep.subr.bf16.mxu0 0
        %304 = vmatpush1.bf16.msra.mxu0 0
        %305 = vmatprep.subr.bf16.mxu0 0
        %306 = vmatpush1.bf16.msra.mxu0 0
        %307 = vmatprep.subr.bf16.mxu0 0
        %308 = vmatpush1.bf16.msra.mxu0 0
        %309 = vmatprep.subr.bf16.mxu0 0
        %310 = vmatpush1.bf16.msra.mxu0 0
        %311 = vmatprep.subr.bf16.mxu0 0
        %312 = vmatpush1.bf16.msra.mxu0 0
        %313 = vmatprep.mubr.bf16.mxu0 0
        %314 = vmatmul.mubr.bf16.gmra.mrb[0].mxu0 %v216
        %v315 = vpop.f32.mrb[0].mxu0
        %v316 = vadd.f32 0.0, %v315
        %v317 = vpop.f32.mrb[0].mxu0
        %v318 = vpop.f32.mrb[0].mxu0
        %v319 = vpop.f32.mrb[0].mxu0
        %320 = vdwg.mxu0
        %v321 = vld [vmem:[%s2] sm:$0x1]
        %v322 = vld [vmem:[%s2 + $0x1] sm:$0x1]
        %v323 = vld [vmem:[%s2 + $0x2] sm:$0x1]
        %v324 = vld [vmem:[%s2 + $0x3] sm:$0x1]
        %v325 = vlaneseq
        %v326 = vshrl.u32 %v325, 7
        %v327 = vsub.s32 0, %v326
        %v328 = vrot.slane %v321, %v327
        %v329 = vmul.f32 %v316, %v328
        %v330 = vlaneseq
        %v331 = vshrl.u32 %v330, 7
        %v332 = vsub.s32 0, %v331
        %v333 = vrot.slane %v322, %v332
        %v334 = vadd.f32 %v329, %v333
        %v335 = vmul.f32 %v334, 31.75
        %v336 = vround.ne.pseudo %v335
        %v337 = vmax.f32 %v336, -128.0
        %v338 = vmin.f32 %v337, 127.0
        %v339 = vrcp.pop 31.75
        %v340 = vmul.f32 %v338, %v339
        %v341 = vld [vmem:[%s209] sm:$0xff]
        %v342 = vmul.f32 %v341, 31.75
        %v343 = vround.ne.pseudo %v342
        %v344 = vmax.f32 %v343, -128.0
        %v345 = vmin.f32 %v344, 127.0
        %v346 = vmul.f32 %v345, %v339
        %v347 = vadd.f32 %v340, %v346
        %vm348 = vcmask 261120
        %v349 = vsel %vm348, %v347, 0.0
        %350 = vadd.xlane.f32.xlu0 %v349
        %v351 = vpop.xlane.xlu0 %350
        %v352 = vrcp.pop 32.0
        %v353 = vmul.f32 %v351, %v352
        %v354 = vsub.f32 %v347, %v353
        %v355 = vmul.f32 %v354, %v354
        %v356 = vsel %vm348, %v355, 0.0
        %357 = vadd.xlane.f32.xlu0 %v356
        %v358 = vpop.xlane.xlu0 %357
        %v359 = vmul.f32 %v358, %v352
        %v360 = vadd.f32 %v359, 1e-12
        %v361 = vrsqrt.pop %v360
        %v362 = vmul.f32 %v354, %v361
        %v363 = vlaneseq
        %v364 = vshrl.u32 %v363, 7
        %v365 = vsub.s32 0, %v364
        %v366 = vrot.slane %v323, %v365
        %v367 = vmul.f32 %v362, %v366
        %v368 = vlaneseq
        %v369 = vshrl.u32 %v368, 7
        %v370 = vsub.s32 0, %v369
        %v371 = vrot.slane %v324, %v370
        %v372 = vadd.f32 %v367, %v371
        %373 = vst.msk [vmem:[%s201] sm:$0xff] %vm348, %v372
        %s374 = sand.u32 %s120, 1
        %s375 = scalar_lea.sflag [#allocation3], %s374
        %s376 = sand.u32 %s120, 1
        %s377 = smul.addr %s376, 8
        %s378 = scalar_lea.vmem [#allocation2], %s377
        // Predicated region
        $region37: #{tpu_custom_call.1} parent=35 // pred_check
          %p379 = pneg %p130
        $region38: #{tpu_custom_call.1} parent=35 // pred_check_branch
          %381 = sbr.rel (%p379) target = $region40
        $region39: #{tpu_custom_call.1} parent=35 // pred_region
          %s383 = ssub.s32 128, 128
          %384 = vsyncadd %s375, %s383
          %s385 = smul.addr %s18, 128
          %s386 = scalar_lea.hbm %s4, %s385
          %s388 = sshll.u32 %s378, 4
          %s389 = int_to_ptr.vmem [resolvable:$true] %s388
          %391 = dma.vmem_to_hbm [thread:$0]  %s389, 128, %s386, %s375
        $region40: #{tpu_custom_call.1} parent=35 // pred_fallthru
          _
      $region36: #{tpu_custom_call.1} parent=5 // pred_fallthru
        _
      %p392 = scmp.le.s32.totalorder 2, %s13
      // Predicated region
      $region41: #{tpu_custom_call.1} parent=5 // pred_check
        %p393 = pneg %p392
      $region42: #{tpu_custom_call.1} parent=5 // pred_check_branch
        %395 = sbr.rel (%p393) target = $region44
      $region43: #{tpu_custom_call.1} parent=5 // pred_region
        %s396 = ssub.s32 %s13, 2
        // Predicated region
        $region45: #{tpu_custom_call.1} parent=43 // pred_check
          %p397 = pneg %p136
        $region46: #{tpu_custom_call.1} parent=43 // pred_check_branch
          %399 = sbr.rel (%p397) target = $region48
        $region47: #{tpu_custom_call.1} parent=43 // pred_region
          %s400 = sand.u32 %s121, 1
          %s401 = scalar_lea.sflag [#allocation3], %s400
          %s402 = sand.u32 %s121, 1
          %s403 = smul.addr %s402, 8
          %s404 = scalar_lea.vmem [#allocation2], %s403
          %405 = dma.done %s401, 128
        $region48: #{tpu_custom_call.1} parent=43 // pred_fallthru
          _
      $region44: #{tpu_custom_call.1} parent=5 // pred_fallthru
        _
    $region6: #{tpu_custom_call.1} parent=1 // loop_footer
      %s17 = sadd.s32 1, %s13
    $region7: #{tpu_custom_call.1} parent=1 // loop_footer_branch
      %12 = sbr.rel target = $region3
    $region8: #{tpu_custom_call.1} parent=1 // loop_exit
      _
    %406 = vsyncpa [#allocation3], 1
    %s407 = scalar_lea.sflag [#allocation3], 1
    %408 = vsyncpa %s407, 1

</llo_original>
